<compile_context>
chip_gen: v7x
topology: tpu7x:2x2x1
jax: 0.10.0
libtpu: 0.0.40
codegen_flags: <defaults>
</compile_context>

<pallas_src>
import math

import jax
import jax.numpy as jnp
import numpy as np
from jax.experimental import pallas as pl
from jax.experimental.pallas import tpu as pltpu

_LANES = 128
_SUBLANES = 8

# Double-buffered working-set budget and scoped-VMEM limit shared by all
# generations (48 MiB < v7x's 64 MiB physical; well under 128 MiB elsewhere).
_BINARY_WS_BUDGET = 24 * 1024 * 1024
_MULTICLASS_BLOCK_TARGET = 4 * 1024 * 1024      # lane-padded input bytes/block
_VMEM_LIMIT_BYTES = 48 * 1024 * 1024


def _compiler_params():
    return pltpu.CompilerParams(
        dimension_semantics=("parallel",),
        vmem_limit_bytes=_VMEM_LIMIT_BYTES,
    )


def _compute_cast(x):
    # bf16 stays bf16 (native VPU/EUP on v6e/v7x; legalized on v5e);
    # everything else computes in f32.
    return x if x.dtype == jnp.bfloat16 else x.astype(jnp.float32)


# --------------------------- multiclass branch ------------------------------


def _multiclass_kernel(x_ref, idx_ref, prob_ref):
    """Per-row max(softmax) + argmax over the class (lane) axis."""
    x = _compute_cast(x_ref[...])                               # (tile_n, C)
    tile_n, c = x.shape
    m = jnp.max(x, axis=1, keepdims=True)                       # (tile_n, 1)
    e = jnp.exp(x - m)
    denom = jnp.sum(e, axis=1, keepdims=True, dtype=jnp.float32)
    # max(softmax(x)) == exp(x_max - x_max) / sum(exp(x - x_max)) == 1/denom
    prob = pl.reciprocal(denom, approx=False)                   # (tile_n, 1) f32
    # argmax: first maximal element (matches torch tie behaviour)
    lane_ids = jax.lax.broadcasted_iota(jnp.int32, (tile_n, c), 1)
    idx = jnp.min(jnp.where(x == m, lane_ids, jnp.int32(c)),
                  axis=1, keepdims=True)                        # (tile_n, 1)

    if idx_ref.shape[0] == 1:
        # Lane-dense (1, tile_n) outputs: transpose the reduced columns to
        # rows (XLU slot, idle here) so stores are unmasked full-width vst.
        idx_ref[...] = jnp.transpose(idx)
        prob_ref[...] = jnp.transpose(prob).astype(prob_ref.dtype)
    else:
        # Column-shaped fallback used only for very large C.
        idx_ref[...] = idx
        prob_ref[...] = prob.astype(prob_ref.dtype)


def _multiclass_tile_rows(n, c, itemsize):
    """Rows per block, sized against the *lane-padded* VMEM footprint."""
    cpad = ((c + _LANES - 1) // _LANES) * _LANES     # VMEM pads C to 128 lanes
    row_bytes = cpad * itemsize
    if n * row_bytes <= _MULTICLASS_BLOCK_TARGET:
        return n                                     # single full-extent block
    rows = max(1, _MULTICLASS_BLOCK_TARGET // row_bytes)
    if rows >= _LANES:
        # Lane-dense outputs need the row tile to be a multiple of 128.
        return int(min((rows // _LANES) * _LANES, 8192))
    # Very large C: a 128-row tile would blow VMEM -> small sublane-aligned
    # tile with column-shaped outputs (output traffic negligible at this C).
    return int(max(_SUBLANES, (rows // _SUBLANES) * _SUBLANES))


def _multiclass_forward(output, tile_rows):
    n, c = output.shape
    rows = (tile_rows if tile_rows is not None
            else _multiclass_tile_rows(n, c, output.dtype.itemsize))
    if rows >= n:
        rows, lane_dense = n, True                   # single full-extent block
    elif rows % _LANES == 0:
        lane_dense = True
    else:
        rows = max(_SUBLANES, (rows // _SUBLANES) * _SUBLANES)
        lane_dense = False

    if lane_dense:
        out_specs = (pl.BlockSpec((1, rows), lambda i: (0, i)),
                     pl.BlockSpec((1, rows), lambda i: (0, i)))
        out_shape = (jax.ShapeDtypeStruct((1, n), jnp.int32),
                     jax.ShapeDtypeStruct((1, n), output.dtype))
    else:
        out_specs = (pl.BlockSpec((rows, 1), lambda i: (i, 0)),
                     pl.BlockSpec((rows, 1), lambda i: (i, 0)))
        out_shape = (jax.ShapeDtypeStruct((n, 1), jnp.int32),
                     jax.ShapeDtypeStruct((n, 1), output.dtype))

    idx, prob = pl.pallas_call(
        _multiclass_kernel,
        grid=(pl.cdiv(n, rows),),
        in_specs=[pl.BlockSpec((rows, c), lambda i: (i, 0))],
        out_specs=out_specs,
        out_shape=out_shape,
        compiler_params=_compiler_params(),
    )(output)
    return idx.reshape(n), prob.reshape(n)


# ----------------------------- binary branch --------------------------------


def _binary_kernel(thr_ref, x_ref, idx_ref, prob_ref):
    """Elementwise sigmoid + threshold on a lane-dense (tile_r, 128) slab."""
    p = jax.nn.sigmoid(_compute_cast(x_ref[...]))
    p_out = p.astype(prob_ref.dtype)
    thr = thr_ref[0].astype(prob_ref.dtype)
    prob_ref[...] = p_out
    # Compare on the value rounded to the output dtype (torch compares the
    # low-precision probability against the threshold).
    idx_ref[...] = (p_out > thr).astype(idx_ref.dtype)


def _binary_tile_rows(rows, itemsize):
    per_row = _LANES * itemsize * 3 * 2              # 1 in + 2 out, 2x buffered
    r = max(_SUBLANES, _BINARY_WS_BUDGET // per_row)
    r = min((r // _SUBLANES) * _SUBLANES, 16384)
    return int(r)


def _binary_pallas(flat, threshold, tile_rows):
    """flat.size must be a multiple of 128; returns flat (idx, prob)."""
    total = flat.shape[0]
    dtype = flat.dtype
    rows = total // _LANES
    tr = (tile_rows if tile_rows is not None
          else _binary_tile_rows(rows, dtype.itemsize))
    if tr >= rows:
        tr = rows
    else:
        tr = max(_SUBLANES, (tr // _SUBLANES) * _SUBLANES)

    x2d = flat.reshape(rows, _LANES)                 # free full-array reshape
    thr = jnp.full((1,), threshold, dtype=jnp.float32)
    idx, prob = pl.pallas_call(
        _binary_kernel,
        grid=(pl.cdiv(rows, tr),),
        in_specs=[
            pl.BlockSpec(memory_space=pltpu.MemorySpace.SMEM),   # threshold
            pl.BlockSpec((tr, _LANES), lambda i: (i, 0)),        # logits slab
        ],
        out_specs=(pl.BlockSpec((tr, _LANES), lambda i: (i, 0)),
                   pl.BlockSpec((tr, _LANES), lambda i: (i, 0))),
        out_shape=(jax.ShapeDtypeStruct((rows, _LANES), dtype),
                   jax.ShapeDtypeStruct((rows, _LANES), dtype)),
        compiler_params=_compiler_params(),
    )(thr, x2d)
    return idx.reshape(-1), prob.reshape(-1)


def _binary_tail_xla(x, threshold, dtype):
    p = jax.nn.sigmoid(_compute_cast(x)).astype(dtype)
    i = (p > jnp.asarray(threshold, dtype=dtype)).astype(dtype)
    return i, p


# ------------------------------- wrapper -------------------------------------


def binarizer_forward(output, threshold=0.5, *, _tile_rows=None):
    """JAX/Pallas equivalent of Binarizer.forward -> (indices, probabilities)."""
    output = jnp.asarray(output)

    if output.ndim == 2 and output.shape[-1] > 1:
        return _multiclass_forward(output, _tile_rows)

    # ---- binary branch: purely elementwise; present a lane-dense slab ----
    orig_shape = output.shape
    dtype = output.dtype
    total = math.prod(orig_shape) if orig_shape else 1
    flat = output.reshape(-1)                        # free
    main = (total // _LANES) * _LANES

    if total < _LANES:
        # Fewer than 128 elements: pad a single lane row (negligible cost).
        padded = jnp.pad(flat, (0, _LANES - total))
        idx, prob = _binary_pallas(padded, threshold, _tile_rows)
        return (idx[:total].reshape(orig_shape),
                prob[:total].reshape(orig_shape))

    if main == total:
        # Aligned: zero wrapper-side copies (pure reshapes in and out).
        idx, prob = _binary_pallas(flat, threshold, _tile_rows)
        return idx.reshape(orig_shape), prob.reshape(orig_shape)

    # Ragged: aligned prefix through the kernel, <128-element tail via XLA.
    idx_m, prob_m = _binary_pallas(flat[:main], threshold, _tile_rows)
    idx_t, prob_t = _binary_tail_xla(flat[main:], threshold, dtype)
    idx = jnp.concatenate([idx_m, idx_t]).reshape(orig_shape)
    prob = jnp.concatenate([prob_m, prob_t]).reshape(orig_shape)
    return idx, prob


# -------------------------------- tests --------------------------------------

if __name__ == "__main__":
    key = jax.random.PRNGKey(0)
    ks = jax.random.split(key, 8)

    # 1) multiclass, f32, single full-extent block
    logits = jax.random.normal(ks[0], (8, 32), dtype=jnp.float32)
    idx, prob = binarizer_forward(logits)
    jax.block_until_ready((idx, prob))
    sm = jax.nn.softmax(logits, axis=1)
    assert idx.shape == (8,) and prob.shape == (8,)
    assert np.allclose(np.asarray(prob), np.asarray(jnp.max(sm, axis=1)), atol=1e-5)
    assert np.array_equal(np.asarray(idx),
                          np.asarray(jnp.argmax(logits, axis=1)).astype(np.int32))

    # 2) multiclass, f32, lane-dense tiled grid with a ragged last block
    logits2 = jax.random.normal(ks[1], (300, 8), dtype=jnp.float32)
    idx2, prob2 = binarizer_forward(logits2, _tile_rows=128)   # grid = 3
    jax.block_until_ready((idx2, prob2))
    sm2 = jax.nn.softmax(logits2, axis=1)
    assert np.allclose(np.asarray(prob2), np.asarray(jnp.max(sm2, axis=1)), atol=1e-5)
    assert np.array_equal(np.asarray(idx2),
                          np.asarray(jnp.argmax(logits2, axis=1)).astype(np.int32))

    # 3) multiclass, f32, column-output fallback path (huge-C style tiling)
    logits3 = jax.random.normal(ks[2], (20, 8), dtype=jnp.float32)
    idx3, prob3 = binarizer_forward(logits3, _tile_rows=8)     # grid = 3
    jax.block_until_ready((idx3, prob3))
    sm3 = jax.nn.softmax(logits3, axis=1)
    assert np.allclose(np.asarray(prob3), np.asarray(jnp.max(sm3, axis=1)), atol=1e-5)
    assert np.array_equal(np.asarray(idx3),
                          np.asarray(jnp.argmax(logits3, axis=1)).astype(np.int32))

    # 4) multiclass, bf16 (bf16-exp path), lane-dense tiled grid
    logits4 = jax.random.normal(ks[3], (256, 64), dtype=jnp.float32).astype(jnp.bfloat16)
    idx4, prob4 = binarizer_forward(logits4, _tile_rows=128)   # grid = 2
    jax.block_until_ready((idx4, prob4))
    ref4 = jnp.max(jax.nn.softmax(logits4.astype(jnp.float32), axis=1), axis=1)
    assert prob4.dtype == jnp.bfloat16
    assert np.allclose(np.asarray(prob4).astype(np.float32), np.asarray(ref4), atol=2e-2)
    assert np.array_equal(np.asarray(idx4),
                          np.asarray(jnp.argmax(logits4, axis=1)).astype(np.int32))

    # 5) binary, f32, aligned total, multi-block grid with a ragged row block
    x5 = jax.random.normal(ks[4], (2560,), dtype=jnp.float32)
    i5, p5 = binarizer_forward(x5, threshold=0.5, _tile_rows=8)
    jax.block_until_ready((i5, p5))
    rp5 = jax.nn.sigmoid(x5)
    assert np.allclose(np.asarray(p5), np.asarray(rp5), atol=1e-6)
    assert np.array_equal(np.asarray(i5), np.asarray((rp5 > 0.5).astype(x5.dtype)))

    # 6) binary, f32, ragged total (kernel prefix + XLA tail), custom threshold
    x6 = jax.random.normal(ks[5], (300,), dtype=jnp.float32)
    i6, p6 = binarizer_forward(x6, threshold=0.3)
    jax.block_until_ready((i6, p6))
    rp6 = jax.nn.sigmoid(x6)
    assert np.allclose(np.asarray(p6), np.asarray(rp6), atol=1e-6)
    assert np.array_equal(np.asarray(i6), np.asarray((rp6 > 0.3).astype(x6.dtype)))

    # 7) binary, f32, canonical (batch, 1) logits (sub-lane-row, tiny pad path)
    x7 = jax.random.normal(ks[6], (8, 1), dtype=jnp.float32)
    i7, p7 = binarizer_forward(x7)
    jax.block_until_ready((i7, p7))
    rp7 = jax.nn.sigmoid(x7)
    assert i7.shape == (8, 1) and p7.shape == (8, 1)
    assert np.allclose(np.asarray(p7), np.asarray(rp7), atol=1e-6)
    assert np.array_equal(np.asarray(i7), np.asarray((rp7 > 0.5).astype(x7.dtype)))

    # 8) binary, bf16 (bf16-sigmoid path); inputs kept off the 0.5 boundary
    r8 = jax.random.normal(ks[7], (256,), dtype=jnp.float32)
    x8 = (jnp.sign(r8) * (jnp.abs(r8) + 0.25)).astype(jnp.bfloat16)
    i8, p8 = binarizer_forward(x8)
    jax.block_until_ready((i8, p8))
    rp8 = jax.nn.sigmoid(x8.astype(jnp.float32))
    assert np.allclose(np.asarray(p8).astype(np.float32), np.asarray(rp8), atol=2e-2)
    assert np.array_equal(np.asarray(i8).astype(np.float32),
                          np.asarray(rp8 > 0.5).astype(np.float32))

    print("KERNEL_OK")
</pallas_src>

<mosaic_0001>
module attributes {stable_mosaic.version = 11 : i64} {
  func.func @_multiclass_kernel(%arg0: i32, %arg1: memref<8x32xf32, #tpu.memory_space<vmem>>, %arg2: memref<1x8xi32, #tpu.memory_space<vmem>>, %arg3: memref<1x8xf32, #tpu.memory_space<vmem>>) attributes {dimension_semantics = [#tpu.dimension_semantics<parallel>], iteration_bounds = array<i64: 1>, scalar_prefetch = 0 : i64, scratch_operands = 0 : i64, tpu.core_type = #tpu.core_type<tc>, window_params = [{transform_indices = @transform_0, window_bounds = array<i64: 8, 32>}, {transform_indices = @transform_1, window_bounds = array<i64: 1, 8>}, {transform_indices = @transform_2, window_bounds = array<i64: 1, 8>}]} {
    %c0 = arith.constant 0 : index
    %c0_0 = arith.constant 0 : index
    %0 = vector.load %arg1[%c0, %c0_0] : memref<8x32xf32, #tpu.memory_space<vmem>>, vector<8x32xf32>
    %cst = arith.constant dense<0xFF800000> : vector<8xf32>
    %1 = vector.multi_reduction <maximumf>, %0, %cst [1] : vector<8x32xf32> to vector<8xf32>
    %2 = vector.shape_cast %1 : vector<8xf32> to vector<8x1xf32>
    %3 = vector.broadcast %2 : vector<8x1xf32> to vector<8x32xf32>
    %4 = arith.subf %0, %3 : vector<8x32xf32>
    %5 = math.exp %4 : vector<8x32xf32>
    %cst_1 = arith.constant dense<0.000000e+00> : vector<8xf32>
    %6 = vector.multi_reduction <add>, %5, %cst_1 [1] : vector<8x32xf32> to vector<8xf32>
    %7 = vector.shape_cast %6 : vector<8xf32> to vector<8x1xf32>
    %8 = tpu.reciprocal %7 : vector<8x1xf32> -> vector<8x1xf32>
    %9 = tpu.iota {dimensions = array<i32: 1>} : vector<8x32xi32>
    %10 = vector.broadcast %2 : vector<8x1xf32> to vector<8x32xf32>
    %11 = arith.cmpf oeq, %0, %10 : vector<8x32xf32>
    %c32_i32 = arith.constant 32 : i32
    %12 = vector.broadcast %c32_i32 : i32 to vector<8x32xi32>
    %13 = arith.select %11, %9, %12 : vector<8x32xi1>, vector<8x32xi32>
    %cst_2 = arith.constant dense<2147483647> : vector<8xi32>
    %14 = vector.multi_reduction <minsi>, %13, %cst_2 [1] : vector<8x32xi32> to vector<8xi32>
    %15 = vector.shape_cast %14 : vector<8xi32> to vector<8x1xi32>
    %16 = tpu.transpose %15, [1, 0] : vector<8x1xi32> -> vector<1x8xi32>
    %c0_3 = arith.constant 0 : index
    %c0_4 = arith.constant 0 : index
    %17 = vector.load %arg2[%c0_3, %c0_4] : memref<1x8xi32, #tpu.memory_space<vmem>>, vector<1x8xi32>
    tpu.vector_store %arg2[%c0_3, %c0_4], %16 {strides = array<i32>} : memref<1x8xi32, #tpu.memory_space<vmem>>, vector<1x8xi32>,
    %18 = tpu.transpose %8, [1, 0] : vector<8x1xf32> -> vector<1x8xf32>
    %c0_5 = arith.constant 0 : index
    %c0_6 = arith.constant 0 : index
    %19 = vector.load %arg3[%c0_5, %c0_6] : memref<1x8xf32, #tpu.memory_space<vmem>>, vector<1x8xf32>
    tpu.vector_store %arg3[%c0_5, %c0_6], %18 {strides = array<i32>} : memref<1x8xf32, #tpu.memory_space<vmem>>, vector<1x8xf32>,
    return
  }
  func.func @transform_0(%arg0: i32) -> (i32, i32) {
    %c0_i32 = arith.constant 0 : i32
    %c0_i32_0 = arith.constant 0 : i32
    return %arg0, %c0_i32 : i32, i32
  }
  func.func @transform_1(%arg0: i32) -> (i32, i32) {
    %c0_i32 = arith.constant 0 : i32
    %c0_i32_0 = arith.constant 0 : i32
    return %c0_i32, %arg0 : i32, i32
  }
  func.func @transform_2(%arg0: i32) -> (i32, i32) {
    %c0_i32 = arith.constant 0 : i32
    %c0_i32_0 = arith.constant 0 : i32
    return %c0_i32, %arg0 : i32, i32
  }
}

</mosaic_0001>

<llo_original>
// kernel: tpu_custom_call.1
$region0: #{tpu_custom_call.1}
  #allocation0 [shape = 'u32[]', space=smem, size = 0x4, offset = 0x4, fixed_abs, tag = 'smem constant byte address 0x4 - core index']
  #allocation1 [shape = 'u32[144,128]{1,0:T(1,128)}', space=vmem, size = 0x12000, scoped, tag = 'internal scratch']
  %s0 = inlined_call_operand.hbm [shape: f32[8,32], index: 0, kind: input, shape index: {}]
  %s1 = inlined_call_operand.hbm [shape: s32[1,8], index: 1, kind: output, shape index: {0}]
  %s2 = inlined_call_operand.hbm [shape: f32[1,8], index: 2, kind: output, shape index: {1}]
  %3 = xla_tuple %s1, %s2
  %s4 = sld [smem:[#allocation0]]
  $region26: #{tpu_custom_call.1} parent=0
    _
  %s6 = ssub.s32 1, %s4
  %s7 = scalar_select 0, %s6, %s4
  $region1: #{tpu_custom_call.1} parent=0
    #allocation2 [shape = 'u8[4096]{0}', space=vmem, size = 0x1000, scoped, tag = 'input window, operand 0, single buffered']
    #allocation3 [shape = 's32[1]{0}', space=sflag, size = 0x4, scoped, tag = 'scoped memory for tpu_custom_call.1']
    #allocation4 [shape = 's32[1]{0}', space=sflag, size = 0x4, scoped, tag = 'scoped memory for tpu_custom_call.1']
    #allocation5 [shape = 'u8[512]{0}', space=vmem, size = 0x400, scoped, tag = 'output window, operand 0, single buffered']
    #allocation6 [shape = 'u8[512]{0}', space=vmem, size = 0x400, scoped, tag = 'output window, operand 1, single buffered']
    #allocation7 [shape = 's32[1]{0}', space=sflag, size = 0x4, scoped, tag = 'scoped memory for tpu_custom_call.1']
    %8 = vsyncpa [#allocation3], 0
    %9 = vsyncpa [#allocation4], 0
    %10 = vsyncpa [#allocation7], 0
    // Predicated region
    $region2: #{tpu_custom_call.1} parent=1 // pred_check
      _
    $region3: #{tpu_custom_call.1} parent=1 // pred_check_branch
      %12 = sbr.rel (0) target = $region5
    $region4: #{tpu_custom_call.1} parent=1 // pred_region
      %s14 = ssub.s32 128, 128
      %15 = vsyncadd [#allocation3], %s14
      %s17 = sshll.u32 [#allocation2], 4
      %s18 = int_to_ptr.vmem [resolvable:$true] %s17
      %20 = dma.hbm_to_vmem [thread:$0]  %s0, 128, %s18, [#allocation3]
    $region5: #{tpu_custom_call.1} parent=1 // pred_fallthru
      _
    // Predicated region
    $region6: #{tpu_custom_call.1} parent=1 // pred_check
      _
    $region7: #{tpu_custom_call.1} parent=1 // pred_check_branch
      %22 = sbr.rel (0) target = $region9
    $region8: #{tpu_custom_call.1} parent=1 // pred_region
      %23 = dma.done [#allocation3], 128
    $region9: #{tpu_custom_call.1} parent=1 // pred_fallthru
      _
    %v24 = vld [vmem:[#allocation2] sm:$0xff]
    %vm25 = vcmask 261120
    %v26 = vsel %vm25, %v24, -inf
    %27 = vmax.xlane.f32.xlu0 %v26
    %v28 = vpop.xlane.xlu0 %27
    %v29 = vsub.f32 %v24, %v28
    %v30 = vmul.f32 %v29, 1.442695
    %v31 = vpow.pop %v30
    %v32 = vsel %vm25, %v31, 0.0
    %33 = vadd.xlane.f32.xlu0 %v32
    %v34 = vpop.xlane.xlu0 %33
    %v35 = vrcp.pop %v34
    %v36 = vlaneseq
    %v37 = vand.u32 %v36, 127
    %vm38 = vcmp.eq.f32.partialorder %v24, %v28
    %v39 = vsel %vm38, %v37, 32
    %v40 = vsel %vm25, %v39, 2147483647
    %v41 = vand.u32 %v40, 65535
    %v42 = vshra.s32 %v40, 16
    %v43 = vcvt.s32.f32 %v41
    %v44 = vcvt.s32.f32 %v42
    %45 = vmin.xlane.f32.xlu0 %v44
    %v46 = vpop.xlane.xlu0 %45
    %vm47 = vcmp.eq.f32.partialorder %v44, %v46
    %v48 = vsel %vm47, %v43, inf
    %49 = vmin.xlane.f32.xlu0 %v48
    %v50 = vpop.xlane.xlu0 %49
    %v51 = vcvt.f32.s32 %v50
    %v52 = vcvt.f32.s32 %v46
    %v53 = vshll.u32 %v52, 16
    %v54 = vadd.s32 %v53, %v51
    %55 = vxpose.xlu0.b32.start [1/16] %v54, 128
    %56 = vxpose.xlu0.b32.cont [2/16] 0, 128
    %57 = vxpose.xlu0.b32.cont [3/16] 0, 128
    %58 = vxpose.xlu0.b32.cont [4/16] 0, 128
    %59 = vxpose.xlu0.b32.cont [5/16] 0, 128
    %60 = vxpose.xlu0.b32.cont [6/16] 0, 128
    %61 = vxpose.xlu0.b32.cont [7/16] 0, 128
    %62 = vxpose.xlu0.b32.cont [8/16] 0, 128
    %63 = vxpose.xlu0.b32.cont [9/16] 0, 128
    %64 = vxpose.xlu0.b32.cont [10/16] 0, 128
    %65 = vxpose.xlu0.b32.cont [11/16] 0, 128
    %66 = vxpose.xlu0.b32.cont [12/16] 0, 128
    %67 = vxpose.xlu0.b32.cont [13/16] 0, 128
    %68 = vxpose.xlu0.b32.cont [14/16] 0, 128
    %69 = vxpose.xlu0.b32.cont [15/16] 0, 128
    %70 = vxpose.xlu0.b32.end [16/16] 0, 128
    %v71 = vpop.trf.xlu0
    %v72 = vpop.trf.xlu0
    %v73 = vpop.trf.xlu0
    %v74 = vpop.trf.xlu0
    %v75 = vpop.trf.xlu0
    %v76 = vpop.trf.xlu0
    %v77 = vpop.trf.xlu0
    %v78 = vpop.trf.xlu0
    %v79 = vpop.trf.xlu0
    %v80 = vpop.trf.xlu0
    %v81 = vpop.trf.xlu0
    %v82 = vpop.trf.xlu0
    %v83 = vpop.trf.xlu0
    %v84 = vpop.trf.xlu0
    %v85 = vpop.trf.xlu0
    %v86 = vpop.trf.xlu0
    %vm87 = vcmask 57344
    %88 = vst.msk [vmem:[#allocation5] sm:$0x1] %vm87, %v71
    %89 = vxpose.xlu0.b32.start [1/16] %v35, 128
    %90 = vxpose.xlu0.b32.cont [2/16] 0.0, 128
    %91 = vxpose.xlu0.b32.cont [3/16] 0.0, 128
    %92 = vxpose.xlu0.b32.cont [4/16] 0.0, 128
    %93 = vxpose.xlu0.b32.cont [5/16] 0.0, 128
    %94 = vxpose.xlu0.b32.cont [6/16] 0.0, 128
    %95 = vxpose.xlu0.b32.cont [7/16] 0.0, 128
    %96 = vxpose.xlu0.b32.cont [8/16] 0.0, 128
    %97 = vxpose.xlu0.b32.cont [9/16] 0.0, 128
    %98 = vxpose.xlu0.b32.cont [10/16] 0.0, 128
    %99 = vxpose.xlu0.b32.cont [11/16] 0.0, 128
    %100 = vxpose.xlu0.b32.cont [12/16] 0.0, 128
    %101 = vxpose.xlu0.b32.cont [13/16] 0.0, 128
    %102 = vxpose.xlu0.b32.cont [14/16] 0.0, 128
    %103 = vxpose.xlu0.b32.cont [15/16] 0.0, 128
    %104 = vxpose.xlu0.b32.end [16/16] 0.0, 128
    %v105 = vpop.trf.xlu0
    %v106 = vpop.trf.xlu0
    %v107 = vpop.trf.xlu0
    %v108 = vpop.trf.xlu0
    %v109 = vpop.trf.xlu0
    %v110 = vpop.trf.xlu0
    %v111 = vpop.trf.xlu0
    %v112 = vpop.trf.xlu0
    %v113 = vpop.trf.xlu0
    %v114 = vpop.trf.xlu0
    %v115 = vpop.trf.xlu0
    %v116 = vpop.trf.xlu0
    %v117 = vpop.trf.xlu0
    %v118 = vpop.trf.xlu0
    %v119 = vpop.trf.xlu0
    %v120 = vpop.trf.xlu0
    %121 = vst.msk [vmem:[#allocation6] sm:$0x1] %vm87, %v105
    // Predicated region
    $region10: #{tpu_custom_call.1} parent=1 // pred_check
      _
    $region11: #{tpu_custom_call.1} parent=1 // pred_check_branch
      %123 = sbr.rel (0) target = $region13
    $region12: #{tpu_custom_call.1} parent=1 // pred_region
      %s125 = ssub.s32 16, 16
      %126 = vsyncadd [#allocation4], %s125
      %s128 = sshll.u32 [#allocation5], 4
      %s129 = int_to_ptr.vmem [resolvable:$true] %s128
      %131 = dma.vmem_to_hbm [thread:$0]  %s129, 16, %s1, [#allocation4]
    $region13: #{tpu_custom_call.1} parent=1 // pred_fallthru
      _
    // Predicated region
    $region14: #{tpu_custom_call.1} parent=1 // pred_check
      _
    $region15: #{tpu_custom_call.1} parent=1 // pred_check_branch
      %133 = sbr.rel (0) target = $region17
    $region16: #{tpu_custom_call.1} parent=1 // pred_region
      %s135 = ssub.s32 16, 16
      %136 = vsyncadd [#allocation7], %s135
      %s138 = sshll.u32 [#allocation6], 4
      %s139 = int_to_ptr.vmem [resolvable:$true] %s138
      %141 = dma.vmem_to_hbm [thread:$0]  %s139, 16, %s2, [#allocation7]
    $region17: #{tpu_custom_call.1} parent=1 // pred_fallthru
      _
    // Predicated region
    $region18: #{tpu_custom_call.1} parent=1 // pred_check
      _
    $region19: #{tpu_custom_call.1} parent=1 // pred_check_branch
      %143 = sbr.rel (0) target = $region21
    $region20: #{tpu_custom_call.1} parent=1 // pred_region
      %144 = dma.done [#allocation4], 16
    $region21: #{tpu_custom_call.1} parent=1 // pred_fallthru
      _
    // Predicated region
    $region22: #{tpu_custom_call.1} parent=1 // pred_check
      _
    $region23: #{tpu_custom_call.1} parent=1 // pred_check_branch
      %146 = sbr.rel (0) target = $region25
    $region24: #{tpu_custom_call.1} parent=1 // pred_region
      %147 = dma.done [#allocation7], 16
    $region25: #{tpu_custom_call.1} parent=1 // pred_fallthru
      _
    %148 = vsyncpa [#allocation3], 1
    %149 = vsyncpa [#allocation4], 1
    %150 = vsyncpa [#allocation7], 1

</llo_original>
